<compile_context>
chip_gen: v7x
topology: tpu7x:2x2x1
jax: 0.10.0
libtpu: 0.0.40
codegen_flags: <defaults>
</compile_context>

<pallas_src>
import math

import jax
import jax.numpy as jnp
from jax.experimental import pallas as pl
from jax.experimental.pallas import tpu as pltpu


# ----------------------------------------------------------------------------
# Irreps configuration (synthetic, deterministic): "32x0e + 16x1o"
#   dim = 32*1 + 16*3 = 80 ; only the 32 leading 0e channels feed the output.
# ----------------------------------------------------------------------------
NUM_SCALAR = 32                              # multiplicity of 0e in irreps_in
NUM_VECTOR = 16                              # multiplicity of 1o in irreps_in
IRREPS_DIM = NUM_SCALAR + 3 * NUM_VECTOR     # 80
OUT_DIM = 1                                  # o3.Irreps("0e").dim


def _round_down(v: int, m: int) -> int:
    return (v // m) * m


def _readout_kernel(x_ref, w_ref, o_ref):
    # x_ref: (TILE_N, IRREPS_DIM) node-major feature tile (native dtype)
    # w_ref: (1, IRREPS_DIM)      f32 path-normalized weights (zeros on 1o),
    #                             constant block index -> VMEM-resident.
    # o_ref: (TILE_N, 1)          f32 per-node readout
    x = x_ref[...].astype(jnp.float32)              # upcast on the VPU (free vs. DMA)
    o_ref[...] = jnp.sum(x * w_ref[...], axis=1, keepdims=True)


def _dense_readout(x, w_row):
    # Plain-JAX reference path (small N and ragged tail rows).
    return x.astype(jnp.float32) @ jnp.reshape(w_row, (-1, 1)).astype(jnp.float32)


def linear_readout(x: jax.Array, w_row: jax.Array, *, tile_n: int = 8192,
                   min_pallas_rows: int = 1024):
    """out[N, 1] = o3.Linear(irreps_in -> "0e") applied to x[N, IRREPS_DIM].

    w_row is the (1, IRREPS_DIM) weight row with the 1/sqrt(fan_in)-scaled 0e
    weights in the 0e slots and zeros everywhere else (the exact o3.Linear
    instruction matrix for a "0e" output).
    """
    n, d = x.shape
    assert w_row.shape == (1, d)

    # Small-N fast path: pallas_call fixed cost + (8,128) padding dominate.
    if n < max(min_pallas_rows, 32):
        return _dense_readout(x, w_row)

    # >= 2 grid steps (uses both v7x TensorCores under "parallel"); keep the
    # row count a multiple of 16 so the same block shape is legal for bf16.
    tile_n = max(16, min(tile_n, _round_down(n // 2, 16)))
    num_tiles = n // tile_n
    m = num_tiles * tile_n                   # rows handled by the kernel

    itemsize = jnp.dtype(x.dtype).itemsize
    # Double-buffered VMEM: the x block (tile_n, 80) and the out block
    # (tile_n, 1) both round up to 128 lanes -> ~tile_n*512 B per buffer (f32).
    vmem_bytes = 4 * tile_n * 512 + (2 << 20)
    vmem_limit = int(min(max(vmem_bytes, 16 << 20), 48 << 20))

    cost = pl.CostEstimate(
        flops=2 * m * d,
        transcendentals=0,
        bytes_accessed=m * d * itemsize + d * 4 + m * 4,
    )

    main = pl.pallas_call(
        _readout_kernel,
        out_shape=jax.ShapeDtypeStruct((m, OUT_DIM), jnp.float32),
        grid_spec=pl.GridSpec(
            grid=(num_tiles,),
            in_specs=[
                # x: contiguous node-major row blocks, pipelined per grid step.
                pl.BlockSpec((tile_n, d), lambda i: (i, 0)),
                # w: constant block index -> stays resident in VMEM.
                pl.BlockSpec((1, d), lambda i: (0, 0)),
            ],
            out_specs=pl.BlockSpec((tile_n, OUT_DIM), lambda i: (i, 0)),
        ),
        compiler_params=pltpu.CompilerParams(
            dimension_semantics=("parallel",),   # independent tiles; v7x 2-TC
            vmem_limit_bytes=vmem_limit,
        ),
        cost_estimate=cost,
    )(x, w_row)

    if m < n:
        # Ragged tail (< tile_n rows): trivial plain-JAX dot, no padded slab.
        tail = _dense_readout(x[m:], w_row)
        return jnp.concatenate([main, tail], axis=0)
    return main


def make_params(key):
    """Deterministic e3nn-style parameters for o3.Linear("32x0e+16x1o" -> "0e").

    The module owns a (32, 1) weight ~ N(0, 1) for the single 0e->0e path,
    applied with 1/sqrt(fan_in) normalization (fan_in = 32).  Non-scalar
    channels have no path to the 0e output, so their weight row entries are 0.
    """
    w_0e = jax.random.normal(key, (NUM_SCALAR, OUT_DIM), dtype=jnp.float32)
    scale = 1.0 / math.sqrt(NUM_SCALAR)
    w_row = (jnp.zeros((1, IRREPS_DIM), jnp.float32)
             .at[0, :NUM_SCALAR].set(w_0e[:, 0] * scale))
    return w_row, w_0e, scale


if __name__ == "__main__":
    key = jax.random.PRNGKey(0)
    k_w, k_x = jax.random.split(key)

    w_row, w_0e, scale = make_params(k_w)

    # Small node-feature batch: 1300 nodes x 80 irrep channels.  Large enough
    # to exercise the Pallas path (2 full tiles at tile_n=512) plus the ragged
    # tail, small enough to stay a toy demo.
    N = 1300
    x = jax.random.normal(k_x, (N, IRREPS_DIM), dtype=jnp.float32)

    out = linear_readout(x, w_row, tile_n=512)
    out = jax.block_until_ready(out)

    # Reference (plain JAX) check of o3.Linear(irreps_in -> "0e") semantics.
    ref = (x[:, :NUM_SCALAR] @ w_0e) * scale
    assert out.shape == (N, OUT_DIM)
    assert jnp.allclose(out, ref, atol=1e-5, rtol=1e-5)

    print("KERNEL_OK")
</pallas_src>

<mosaic_0001>
module attributes {stable_mosaic.version = 11 : i64} {
  func.func @_readout_kernel(%arg0: i32, %arg1: memref<512x80xf32, #tpu.memory_space<vmem>>, %arg2: memref<1x80xf32, #tpu.memory_space<vmem>>, %arg3: memref<512x1xf32, #tpu.memory_space<vmem>>) attributes {dimension_semantics = [#tpu.dimension_semantics<parallel>], iteration_bounds = array<i64: 2>, scalar_prefetch = 0 : i64, scratch_operands = 0 : i64, tpu.core_type = #tpu.core_type<tc>, window_params = [{transform_indices = @transform_0, window_bounds = array<i64: 512, 80>}, {pipeline_mode = #tpu.pipeline_mode<synchronous>, transform_indices = @transform_1, window_bounds = array<i64: 1, 80>}, {transform_indices = @transform_2, window_bounds = array<i64: 512, 1>}]} {
    %c0 = arith.constant 0 : index
    %c0_0 = arith.constant 0 : index
    %0 = vector.load %arg1[%c0, %c0_0] : memref<512x80xf32, #tpu.memory_space<vmem>>, vector<512x80xf32>
    %c0_1 = arith.constant 0 : index
    %c0_2 = arith.constant 0 : index
    %1 = vector.load %arg2[%c0_1, %c0_2] : memref<1x80xf32, #tpu.memory_space<vmem>>, vector<1x80xf32>
    %2 = vector.broadcast %1 : vector<1x80xf32> to vector<512x80xf32>
    %3 = arith.mulf %0, %2 : vector<512x80xf32>
    %cst = arith.constant dense<0.000000e+00> : vector<512xf32>
    %4 = vector.multi_reduction <add>, %3, %cst [1] : vector<512x80xf32> to vector<512xf32>
    %5 = vector.shape_cast %4 : vector<512xf32> to vector<512x1xf32>
    %c0_3 = arith.constant 0 : index
    %c0_4 = arith.constant 0 : index
    %6 = vector.load %arg3[%c0_3, %c0_4] : memref<512x1xf32, #tpu.memory_space<vmem>>, vector<512x1xf32>
    tpu.vector_store %arg3[%c0_3, %c0_4], %5 {strides = array<i32>} : memref<512x1xf32, #tpu.memory_space<vmem>>, vector<512x1xf32>,
    return
  }
  func.func @transform_0(%arg0: i32) -> (i32, i32) {
    %c0_i32 = arith.constant 0 : i32
    %c0_i32_0 = arith.constant 0 : i32
    return %arg0, %c0_i32 : i32, i32
  }
  func.func @transform_1(%arg0: i32) -> (i32, i32) {
    %c0_i32 = arith.constant 0 : i32
    %c0_i32_0 = arith.constant 0 : i32
    %c0_i32_1 = arith.constant 0 : i32
    return %c0_i32, %c0_i32_0 : i32, i32
  }
  func.func @transform_2(%arg0: i32) -> (i32, i32) {
    %c0_i32 = arith.constant 0 : i32
    %c0_i32_0 = arith.constant 0 : i32
    return %arg0, %c0_i32 : i32, i32
  }
}

</mosaic_0001>

<llo_original>
// kernel: tpu_custom_call.1
$region0: #{tpu_custom_call.1}
  #allocation0 [shape = 'u32[]', space=smem, size = 0x4, offset = 0x4, fixed_abs, tag = 'smem constant byte address 0x4 - core index']
  #allocation1 [shape = 'u32[144,128]{1,0:T(1,128)}', space=vmem, size = 0x12000, scoped, tag = 'internal scratch']
  %s0 = inlined_call_operand.vmem [shape: f32[1300,80], index: 0, kind: input, shape index: {}]
  %s1 = inlined_call_operand.vmem [shape: f32[1,80], index: 1, kind: input, shape index: {}]
  %s2 = inlined_call_operand.vmem [shape: f32[1024,1], index: 2, kind: output, shape index: {}]
  %s3 = sld [smem:[#allocation0]]
  $region41: #{tpu_custom_call.1} parent=0
    _
  %s5 = ssub.s32 1, %s3
  %s6 = scalar_select 0, %s5, %s3
  loop: start=0, step=1, limit=4
  $region2: #{tpu_custom_call.1} parent=0 // loop_pre_header
    _
  $region3: #{tpu_custom_call.1} parent=0 // loop_header
    %s8 = sphi 0, %s12
    %p9 = scmp.ge.s32.totalorder %s8, 4
    %s18 = sphi 0, %s20
    %s21 = sphi 0, %s18
    %s22 = sphi 0, %s21
    %s38 = sphi 0, %s22
    %s42 = sphi 0, %s42
    %s44 = sphi 0, %s42
    %s45 = sphi 0, %s44
    %s59 = sphi 0, %s45
    %s65 = sphi 0, %s67
    %s68 = sphi 0, %s65
    %s69 = sphi 0, %s68
    %s85 = sphi 0, %s69
  $region4: #{tpu_custom_call.1} parent=0 // loop_header_branch
    %11 = sbr.rel (%p9) target = $region8
  $region5: #{tpu_custom_call.1} parent=0 // loop_body
    %s13 = ssub.s32 %s8, 1
    %s14 = ssub.s32 %s8, 2
    %s15 = sadd.s32 %s8, 1
    %s16 = ssub.s32 %s8, %s15
    %p17 = scmp.eq.s32.totalorder %s16, 0
    %s19 = sadd.s32 %s18, 1
    %s20 = scalar_select %p17, %s18, %s19
    %p23 = pneg %p17
    %p24 = scmp.eq.s32.totalorder %s8, 1
    %p25 = por %p23, %p24
    %p26 = scmp.ne.s32.totalorder %s18, %s21
    %p27 = scmp.eq.s32.totalorder %s8, 0
    %p28 = por %p26, %p27
    %p29 = scmp.ne.s32.totalorder %s18, %s21
    %p30 = scmp.eq.s32.totalorder %s13, 1
    %p31 = por %p29, %p30
    %p32 = scmp.ne.s32.totalorder %s21, %s22
    %p33 = scmp.eq.s32.totalorder %s13, 0
    %p34 = por %p32, %p33
    %p35 = scmp.ne.s32.totalorder %s21, %s22
    %p36 = scmp.eq.s32.totalorder %s14, 1
    %p37 = por %p35, %p36
    %p39 = scmp.ne.s32.totalorder %s22, %s38
    %p40 = scmp.eq.s32.totalorder %s14, 0
    %p41 = por %p39, %p40
    %s43 = sadd.s32 %s42, 1
    %p46 = scmp.eq.s32.totalorder %s8, 1
    %p47 = scmp.ne.s32.totalorder %s42, %s44
    %p48 = scmp.eq.s32.totalorder %s8, 0
    %p49 = por %p47, %p48
    %p50 = scmp.ne.s32.totalorder %s42, %s44
    %p51 = scmp.eq.s32.totalorder %s13, 1
    %p52 = por %p50, %p51
    %p53 = scmp.ne.s32.totalorder %s44, %s45
    %p54 = scmp.eq.s32.totalorder %s13, 0
    %p55 = por %p53, %p54
    %p56 = scmp.ne.s32.totalorder %s44, %s45
    %p57 = scmp.eq.s32.totalorder %s14, 1
    %p58 = por %p56, %p57
    %p60 = scmp.ne.s32.totalorder %s45, %s59
    %p61 = scmp.eq.s32.totalorder %s14, 0
    %p62 = por %p60, %p61
    %s63 = ssub.s32 %s8, %s15
    %p64 = scmp.eq.s32.totalorder %s63, 0
    %s66 = sadd.s32 %s65, 1
    %s67 = scalar_select %p64, %s65, %s66
    %p70 = pneg %p64
    %p71 = scmp.eq.s32.totalorder %s8, 1
    %p72 = por %p70, %p71
    %p73 = scmp.ne.s32.totalorder %s65, %s68
    %p74 = scmp.eq.s32.totalorder %s8, 0
    %p75 = por %p73, %p74
    %p76 = scmp.ne.s32.totalorder %s65, %s68
    %p77 = scmp.eq.s32.totalorder %s13, 1
    %p78 = por %p76, %p77
    %p79 = scmp.ne.s32.totalorder %s68, %s69
    %p80 = scmp.eq.s32.totalorder %s13, 0
    %p81 = por %p79, %p80
    %p82 = scmp.ne.s32.totalorder %s68, %s69
    %p83 = scmp.eq.s32.totalorder %s14, 1
    %p84 = por %p82, %p83
    %p86 = scmp.ne.s32.totalorder %s69, %s85
    %p87 = scmp.eq.s32.totalorder %s14, 0
    %p88 = por %p86, %p87
    %p89 = scmp.le.s32.totalorder 1, %s8
    %p90 = scmp.lt.s32.totalorder %s8, 3
    %p91 = pnand %p89, %p90
    %p92 = pneg %p91
    // Predicated region
    $region9: #{tpu_custom_call.1} parent=5 // pred_check
      _
    $region10: #{tpu_custom_call.1} parent=5 // pred_check_branch
      %94 = sbr.rel (%p91) target = $region12
    $region11: #{tpu_custom_call.1} parent=5 // pred_region
      %s95 = ssub.s32 %s8, 1
      // Predicated region
      $region13: #{tpu_custom_call.1} parent=11 // pred_check
        %p96 = pneg %p55
      $region14: #{tpu_custom_call.1} parent=11 // pred_check_branch
        %98 = sbr.rel (%p96) target = $region16
      $region15: #{tpu_custom_call.1} parent=11 // pred_region
        _
      $region16: #{tpu_custom_call.1} parent=11 // pred_fallthru
        _
    $region12: #{tpu_custom_call.1} parent=5 // pred_fallthru
      _
    %p99 = scmp.lt.s32.totalorder %s8, 2
    // Predicated region
    $region17: #{tpu_custom_call.1} parent=5 // pred_check
      %p100 = pneg %p99
    $region18: #{tpu_custom_call.1} parent=5 // pred_check_branch
      %102 = sbr.rel (%p100) target = $region20
    $region19: #{tpu_custom_call.1} parent=5 // pred_region
      // Predicated region
      $region21: #{tpu_custom_call.1} parent=19 // pred_check
        %p103 = pneg %p28
      $region22: #{tpu_custom_call.1} parent=19 // pred_check_branch
        %105 = sbr.rel (%p103) target = $region24
      $region23: #{tpu_custom_call.1} parent=19 // pred_region
        %s106 = smul.u32 64, %s8
        %s107 = ssub.s32 163, %s106
        %p108 = scmp.lt.s32.totalorder %s107, 64
        %s109 = scalar_select %p108, %s107, 64
        %s110 = smul.u32 128, %s109
        %p111 = scmp.lt.s32.totalorder %s106, 162
        %s112 = scalar_select %p111, %s106, 162
        %s113 = smul.addr %s112, 8
        %s114 = scalar_lea.vmem %s0, %s113
        %s115 = smul.u32 64, %s8
        %s116 = ssub.s32 163, %s115
        %p117 = scmp.lt.s32.totalorder %s116, 64
        %s118 = scalar_select %p117, %s116, 64
        %s119 = smul.u32 128, %s118
      $region24: #{tpu_custom_call.1} parent=19 // pred_fallthru
        _
    $region20: #{tpu_custom_call.1} parent=5 // pred_fallthru
      _
    %p120 = scmp.le.s32.totalorder 1, %s8
    %p121 = scmp.lt.s32.totalorder %s8, 3
    %p122 = pnand %p120, %p121
    %p123 = pneg %p122
    // Predicated region
    $region25: #{tpu_custom_call.1} parent=5 // pred_check
      _
    $region26: #{tpu_custom_call.1} parent=5 // pred_check_branch
      %125 = sbr.rel (%p122) target = $region28
    $region27: #{tpu_custom_call.1} parent=5 // pred_region
      %s126 = ssub.s32 %s8, 1
      %s127 = smul.u32 64, %s13
      %s128 = ssub.s32 163, %s127
      %p129 = scmp.lt.s32.totalorder %s128, 64
      %s130 = scalar_select %p129, %s128, 64
      %s131 = smul.u32 128, %s130
      %p132 = scmp.lt.s32.totalorder %s127, 162
      %s133 = scalar_select %p132, %s127, 162
      %s134 = smul.addr %s133, 8
      %s135 = scalar_lea.vmem %s0, %s134
      %p136 = pneg %p34
      %p137 = pneg %p31
      %p138 = pneg %p55
      %p139 = pneg %p52
      %p140 = pneg %p81
      %p141 = pneg %p78
      %s142 = smul.u32 64, %s13
      %p143 = scmp.lt.s32.totalorder %s142, 127
      %s144 = scalar_select %p143, %s142, 127
      %s145 = smul.addr %s144, 8
      %s146 = scalar_lea.vmem %s2, %s145
      %s147 = smul.u32 64, %s13
      %s148 = ssub.s32 163, %s147
      %p149 = scmp.lt.s32.totalorder %s148, 64
      %s150 = scalar_select %p149, %s148, 64
      %s151 = smul.u32 128, %s150
      %p152 = scmp.lt.s32.totalorder %s147, 162
      %s153 = scalar_select %p152, %s147, 162
      %s154 = smul.addr %s153, 8
      %s155 = scalar_lea.vmem %s0, %s154
      %s156 = smul.u32 64, %s13
      %s157 = ssub.s32 163, %s156
      %p158 = scmp.lt.s32.totalorder %s157, 64
      %s159 = scalar_select %p158, %s157, 64
      %s160 = smul.u32 128, %s159
      %s161 = smul.u32 64, %s13
      %p162 = scmp.lt.s32.totalorder %s161, 127
      %s163 = scalar_select %p162, %s161, 127
      %s164 = smul.addr %s163, 8
      %s165 = scalar_lea.vmem %s2, %s164
      %s166 = smul.u32 64, %s13
      %v167 = vld [vmem:[%s155] sm:$0xff]
      %v168 = vld [vmem:[%s155 + $0x8] sm:$0xff]
      %v169 = vld [vmem:[%s155 + $0x10] sm:$0xff]
      %v170 = vld [vmem:[%s155 + $0x18] sm:$0xff]
      %v171 = vld [vmem:[%s155 + $0x20] sm:$0xff]
      %v172 = vld [vmem:[%s155 + $0x28] sm:$0xff]
      %v173 = vld [vmem:[%s155 + $0x30] sm:$0xff]
      %v174 = vld [vmem:[%s155 + $0x38] sm:$0xff]
      %v175 = vld [vmem:[%s155 + $0x40] sm:$0xff]
      %v176 = vld [vmem:[%s155 + $0x48] sm:$0xff]
      %v177 = vld [vmem:[%s155 + $0x50] sm:$0xff]
      %v178 = vld [vmem:[%s155 + $0x58] sm:$0xff]
      %v179 = vld [vmem:[%s155 + $0x60] sm:$0xff]
      %v180 = vld [vmem:[%s155 + $0x68] sm:$0xff]
      %v181 = vld [vmem:[%s155 + $0x70] sm:$0xff]
      %v182 = vld [vmem:[%s155 + $0x78] sm:$0xff]
      %v183 = vld [vmem:[%s155 + $0x80] sm:$0xff]
      %v184 = vld [vmem:[%s155 + $0x88] sm:$0xff]
      %v185 = vld [vmem:[%s155 + $0x90] sm:$0xff]
      %v186 = vld [vmem:[%s155 + $0x98] sm:$0xff]
      %v187 = vld [vmem:[%s155 + $0xa0] sm:$0xff]
      %v188 = vld [vmem:[%s155 + $0xa8] sm:$0xff]
      %v189 = vld [vmem:[%s155 + $0xb0] sm:$0xff]
      %v190 = vld [vmem:[%s155 + $0xb8] sm:$0xff]
      %v191 = vld [vmem:[%s155 + $0xc0] sm:$0xff]
      %v192 = vld [vmem:[%s155 + $0xc8] sm:$0xff]
      %v193 = vld [vmem:[%s155 + $0xd0] sm:$0xff]
      %v194 = vld [vmem:[%s155 + $0xd8] sm:$0xff]
      %v195 = vld [vmem:[%s155 + $0xe0] sm:$0xff]
      %v196 = vld [vmem:[%s155 + $0xe8] sm:$0xff]
      %v197 = vld [vmem:[%s155 + $0xf0] sm:$0xff]
      %v198 = vld [vmem:[%s155 + $0xf8] sm:$0xff]
      %v199 = vld [vmem:[%s155 + $0x100] sm:$0xff]
      %v200 = vld [vmem:[%s155 + $0x108] sm:$0xff]
      %v201 = vld [vmem:[%s155 + $0x110] sm:$0xff]
      %v202 = vld [vmem:[%s155 + $0x118] sm:$0xff]
      %v203 = vld [vmem:[%s155 + $0x120] sm:$0xff]
      %v204 = vld [vmem:[%s155 + $0x128] sm:$0xff]
      %v205 = vld [vmem:[%s155 + $0x130] sm:$0xff]
      %v206 = vld [vmem:[%s155 + $0x138] sm:$0xff]
      %v207 = vld [vmem:[%s155 + $0x140] sm:$0xff]
      %v208 = vld [vmem:[%s155 + $0x148] sm:$0xff]
      %v209 = vld [vmem:[%s155 + $0x150] sm:$0xff]
      %v210 = vld [vmem:[%s155 + $0x158] sm:$0xff]
      %v211 = vld [vmem:[%s155 + $0x160] sm:$0xff]
      %v212 = vld [vmem:[%s155 + $0x168] sm:$0xff]
      %v213 = vld [vmem:[%s155 + $0x170] sm:$0xff]
      %v214 = vld [vmem:[%s155 + $0x178] sm:$0xff]
      %v215 = vld [vmem:[%s155 + $0x180] sm:$0xff]
      %v216 = vld [vmem:[%s155 + $0x188] sm:$0xff]
      %v217 = vld [vmem:[%s155 + $0x190] sm:$0xff]
      %v218 = vld [vmem:[%s155 + $0x198] sm:$0xff]
      %v219 = vld [vmem:[%s155 + $0x1a0] sm:$0xff]
      %v220 = vld [vmem:[%s155 + $0x1a8] sm:$0xff]
      %v221 = vld [vmem:[%s155 + $0x1b0] sm:$0xff]
      %v222 = vld [vmem:[%s155 + $0x1b8] sm:$0xff]
      %v223 = vld [vmem:[%s155 + $0x1c0] sm:$0xff]
      %v224 = vld [vmem:[%s155 + $0x1c8] sm:$0xff]
      %v225 = vld [vmem:[%s155 + $0x1d0] sm:$0xff]
      %v226 = vld [vmem:[%s155 + $0x1d8] sm:$0xff]
      %v227 = vld [vmem:[%s155 + $0x1e0] sm:$0xff]
      %v228 = vld [vmem:[%s155 + $0x1e8] sm:$0xff]
      %v229 = vld [vmem:[%s155 + $0x1f0] sm:$0xff]
      %v230 = vld [vmem:[%s155 + $0x1f8] sm:$0xff]
      %v231 = vld [vmem:[%s1] sm:$0x1]
      %v233 = vlaneseq
      %v234 = vshrl.u32 %v233, 7
      %v235 = vsub.s32 0, %v234
      %v236 = vrot.slane %v231, %v235
      %v238 = vmul.f32 %v167, %v236
      %v239 = vmul.f32 %v168, %v236
      %v240 = vmul.f32 %v169, %v236
      %v241 = vmul.f32 %v170, %v236
      %v242 = vmul.f32 %v171, %v236
      %v243 = vmul.f32 %v172, %v236
      %v244 = vmul.f32 %v173, %v236
      %v245 = vmul.f32 %v174, %v236
      %v246 = vmul.f32 %v175, %v236
      %v247 = vmul.f32 %v176, %v236
      %v248 = vmul.f32 %v177, %v236
      %v249 = vmul.f32 %v178, %v236
      %v250 = vmul.f32 %v179, %v236
      %v251 = vmul.f32 %v180, %v236
      %v252 = vmul.f32 %v181, %v236
      %v253 = vmul.f32 %v182, %v236
      %v254 = vmul.f32 %v183, %v236
      %v255 = vmul.f32 %v184, %v236
      %v256 = vmul.f32 %v185, %v236
      %v257 = vmul.f32 %v186, %v236
      %v258 = vmul.f32 %v187, %v236
      %v259 = vmul.f32 %v188, %v236
      %v260 = vmul.f32 %v189, %v236
      %v261 = vmul.f32 %v190, %v236
      %v262 = vmul.f32 %v191, %v236
      %v263 = vmul.f32 %v192, %v236
      %v264 = vmul.f32 %v193, %v236
      %v265 = vmul.f32 %v194, %v236
      %v266 = vmul.f32 %v195, %v236
      %v267 = vmul.f32 %v196, %v236
      %v268 = vmul.f32 %v197, %v236
      %v269 = vmul.f32 %v198, %v236
      %v270 = vmul.f32 %v199, %v236
      %v271 = vmul.f32 %v200, %v236
      %v272 = vmul.f32 %v201, %v236
      %v273 = vmul.f32 %v202, %v236
      %v274 = vmul.f32 %v203, %v236
      %v275 = vmul.f32 %v204, %v236
      %v276 = vmul.f32 %v205, %v236
      %v277 = vmul.f32 %v206, %v236
      %v278 = vmul.f32 %v207, %v236
      %v279 = vmul.f32 %v208, %v236
      %v280 = vmul.f32 %v209, %v236
      %v281 = vmul.f32 %v210, %v236
      %v282 = vmul.f32 %v211, %v236
      %v283 = vmul.f32 %v212, %v236
      %v284 = vmul.f32 %v213, %v236
      %v285 = vmul.f32 %v214, %v236
      %v286 = vmul.f32 %v215, %v236
      %v287 = vmul.f32 %v216, %v236
      %v288 = vmul.f32 %v217, %v236
      %v289 = vmul.f32 %v218, %v236
      %v290 = vmul.f32 %v219, %v236
      %v291 = vmul.f32 %v220, %v236
      %v292 = vmul.f32 %v221, %v236
      %v293 = vmul.f32 %v222, %v236
      %v294 = vmul.f32 %v223, %v236
      %v295 = vmul.f32 %v224, %v236
      %v296 = vmul.f32 %v225, %v236
      %v297 = vmul.f32 %v226, %v236
      %v298 = vmul.f32 %v227, %v236
      %v299 = vmul.f32 %v228, %v236
      %v300 = vmul.f32 %v229, %v236
      %v301 = vmul.f32 %v230, %v236
      %vm302 = vcmask 654336
      %v303 = vsel %vm302, %v238, 0.0
      %304 = vadd.xlane.f32.xlu0 %v303
      %v305 = vpop.xlane.xlu0 %304
      %v306 = vsel %vm302, %v239, 0.0
      %307 = vadd.xlane.f32.xlu0 %v306
      %v308 = vpop.xlane.xlu0 %307
      %v309 = vsel %vm302, %v240, 0.0
      %310 = vadd.xlane.f32.xlu0 %v309
      %v311 = vpop.xlane.xlu0 %310
      %v312 = vsel %vm302, %v241, 0.0
      %313 = vadd.xlane.f32.xlu0 %v312
      %v314 = vpop.xlane.xlu0 %313
      %v315 = vsel %vm302, %v242, 0.0
      %316 = vadd.xlane.f32.xlu0 %v315
      %v317 = vpop.xlane.xlu0 %316
      %v318 = vsel %vm302, %v243, 0.0
      %319 = vadd.xlane.f32.xlu0 %v318
      %v320 = vpop.xlane.xlu0 %319
      %v321 = vsel %vm302, %v244, 0.0
      %322 = vadd.xlane.f32.xlu0 %v321
      %v323 = vpop.xlane.xlu0 %322
      %v324 = vsel %vm302, %v245, 0.0
      %325 = vadd.xlane.f32.xlu0 %v324
      %v326 = vpop.xlane.xlu0 %325
      %v327 = vsel %vm302, %v246, 0.0
      %328 = vadd.xlane.f32.xlu0 %v327
      %v329 = vpop.xlane.xlu0 %328
      %v330 = vsel %vm302, %v247, 0.0
      %331 = vadd.xlane.f32.xlu0 %v330
      %v332 = vpop.xlane.xlu0 %331
      %v333 = vsel %vm302, %v248, 0.0
      %334 = vadd.xlane.f32.xlu0 %v333
      %v335 = vpop.xlane.xlu0 %334
      %v336 = vsel %vm302, %v249, 0.0
      %337 = vadd.xlane.f32.xlu0 %v336
      %v338 = vpop.xlane.xlu0 %337
      %v339 = vsel %vm302, %v250, 0.0
      %340 = vadd.xlane.f32.xlu0 %v339
      %v341 = vpop.xlane.xlu0 %340
      %v342 = vsel %vm302, %v251, 0.0
      %343 = vadd.xlane.f32.xlu0 %v342
      %v344 = vpop.xlane.xlu0 %343
      %v345 = vsel %vm302, %v252, 0.0
      %346 = vadd.xlane.f32.xlu0 %v345
      %v347 = vpop.xlane.xlu0 %346
      %v348 = vsel %vm302, %v253, 0.0
      %349 = vadd.xlane.f32.xlu0 %v348
      %v350 = vpop.xlane.xlu0 %349
      %v351 = vsel %vm302, %v254, 0.0
      %352 = vadd.xlane.f32.xlu0 %v351
      %v353 = vpop.xlane.xlu0 %352
      %v354 = vsel %vm302, %v255, 0.0
      %355 = vadd.xlane.f32.xlu0 %v354
      %v356 = vpop.xlane.xlu0 %355
      %v357 = vsel %vm302, %v256, 0.0
      %358 = vadd.xlane.f32.xlu0 %v357
      %v359 = vpop.xlane.xlu0 %358
      %v360 = vsel %vm302, %v257, 0.0
      %361 = vadd.xlane.f32.xlu0 %v360
      %v362 = vpop.xlane.xlu0 %361
      %v363 = vsel %vm302, %v258, 0.0
      %364 = vadd.xlane.f32.xlu0 %v363
      %v365 = vpop.xlane.xlu0 %364
      %v366 = vsel %vm302, %v259, 0.0
      %367 = vadd.xlane.f32.xlu0 %v366
      %v368 = vpop.xlane.xlu0 %367
      %v369 = vsel %vm302, %v260, 0.0
      %370 = vadd.xlane.f32.xlu0 %v369
      %v371 = vpop.xlane.xlu0 %370
      %v372 = vsel %vm302, %v261, 0.0
      %373 = vadd.xlane.f32.xlu0 %v372
      %v374 = vpop.xlane.xlu0 %373
      %v375 = vsel %vm302, %v262, 0.0
      %376 = vadd.xlane.f32.xlu0 %v375
      %v377 = vpop.xlane.xlu0 %376
      %v378 = vsel %vm302, %v263, 0.0
      %379 = vadd.xlane.f32.xlu0 %v378
      %v380 = vpop.xlane.xlu0 %379
      %v381 = vsel %vm302, %v264, 0.0
      %382 = vadd.xlane.f32.xlu0 %v381
      %v383 = vpop.xlane.xlu0 %382
      %v384 = vsel %vm302, %v265, 0.0
      %385 = vadd.xlane.f32.xlu0 %v384
      %v386 = vpop.xlane.xlu0 %385
      %v387 = vsel %vm302, %v266, 0.0
      %388 = vadd.xlane.f32.xlu0 %v387
      %v389 = vpop.xlane.xlu0 %388
      %v390 = vsel %vm302, %v267, 0.0
      %391 = vadd.xlane.f32.xlu0 %v390
      %v392 = vpop.xlane.xlu0 %391
      %v393 = vsel %vm302, %v268, 0.0
      %394 = vadd.xlane.f32.xlu0 %v393
      %v395 = vpop.xlane.xlu0 %394
      %v396 = vsel %vm302, %v269, 0.0
      %397 = vadd.xlane.f32.xlu0 %v396
      %v398 = vpop.xlane.xlu0 %397
      %v399 = vsel %vm302, %v270, 0.0
      %400 = vadd.xlane.f32.xlu0 %v399
      %v401 = vpop.xlane.xlu0 %400
      %v402 = vsel %vm302, %v271, 0.0
      %403 = vadd.xlane.f32.xlu0 %v402
      %v404 = vpop.xlane.xlu0 %403
      %v405 = vsel %vm302, %v272, 0.0
      %406 = vadd.xlane.f32.xlu0 %v405
      %v407 = vpop.xlane.xlu0 %406
      %v408 = vsel %vm302, %v273, 0.0
      %409 = vadd.xlane.f32.xlu0 %v408
      %v410 = vpop.xlane.xlu0 %409
      %v411 = vsel %vm302, %v274, 0.0
      %412 = vadd.xlane.f32.xlu0 %v411
      %v413 = vpop.xlane.xlu0 %412
      %v414 = vsel %vm302, %v275, 0.0
      %415 = vadd.xlane.f32.xlu0 %v414
      %v416 = vpop.xlane.xlu0 %415
      %v417 = vsel %vm302, %v276, 0.0
      %418 = vadd.xlane.f32.xlu0 %v417
      %v419 = vpop.xlane.xlu0 %418
      %v420 = vsel %vm302, %v277, 0.0
      %421 = vadd.xlane.f32.xlu0 %v420
      %v422 = vpop.xlane.xlu0 %421
      %v423 = vsel %vm302, %v278, 0.0
      %424 = vadd.xlane.f32.xlu0 %v423
      %v425 = vpop.xlane.xlu0 %424
      %v426 = vsel %vm302, %v279, 0.0
      %427 = vadd.xlane.f32.xlu0 %v426
      %v428 = vpop.xlane.xlu0 %427
      %v429 = vsel %vm302, %v280, 0.0
      %430 = vadd.xlane.f32.xlu0 %v429
      %v431 = vpop.xlane.xlu0 %430
      %v432 = vsel %vm302, %v281, 0.0
      %433 = vadd.xlane.f32.xlu0 %v432
      %v434 = vpop.xlane.xlu0 %433
      %v435 = vsel %vm302, %v282, 0.0
      %436 = vadd.xlane.f32.xlu0 %v435
      %v437 = vpop.xlane.xlu0 %436
      %v438 = vsel %vm302, %v283, 0.0
      %439 = vadd.xlane.f32.xlu0 %v438
      %v440 = vpop.xlane.xlu0 %439
      %v441 = vsel %vm302, %v284, 0.0
      %442 = vadd.xlane.f32.xlu0 %v441
      %v443 = vpop.xlane.xlu0 %442
      %v444 = vsel %vm302, %v285, 0.0
      %445 = vadd.xlane.f32.xlu0 %v444
      %v446 = vpop.xlane.xlu0 %445
      %v447 = vsel %vm302, %v286, 0.0
      %448 = vadd.xlane.f32.xlu0 %v447
      %v449 = vpop.xlane.xlu0 %448
      %v450 = vsel %vm302, %v287, 0.0
      %451 = vadd.xlane.f32.xlu0 %v450
      %v452 = vpop.xlane.xlu0 %451
      %v453 = vsel %vm302, %v288, 0.0
      %454 = vadd.xlane.f32.xlu0 %v453
      %v455 = vpop.xlane.xlu0 %454
      %v456 = vsel %vm302, %v289, 0.0
      %457 = vadd.xlane.f32.xlu0 %v456
      %v458 = vpop.xlane.xlu0 %457
      %v459 = vsel %vm302, %v290, 0.0
      %460 = vadd.xlane.f32.xlu0 %v459
      %v461 = vpop.xlane.xlu0 %460
      %v462 = vsel %vm302, %v291, 0.0
      %463 = vadd.xlane.f32.xlu0 %v462
      %v464 = vpop.xlane.xlu0 %463
      %v465 = vsel %vm302, %v292, 0.0
      %466 = vadd.xlane.f32.xlu0 %v465
      %v467 = vpop.xlane.xlu0 %466
      %v468 = vsel %vm302, %v293, 0.0
      %469 = vadd.xlane.f32.xlu0 %v468
      %v470 = vpop.xlane.xlu0 %469
      %v471 = vsel %vm302, %v294, 0.0
      %472 = vadd.xlane.f32.xlu0 %v471
      %v473 = vpop.xlane.xlu0 %472
      %v474 = vsel %vm302, %v295, 0.0
      %475 = vadd.xlane.f32.xlu0 %v474
      %v476 = vpop.xlane.xlu0 %475
      %v477 = vsel %vm302, %v296, 0.0
      %478 = vadd.xlane.f32.xlu0 %v477
      %v479 = vpop.xlane.xlu0 %478
      %v480 = vsel %vm302, %v297, 0.0
      %481 = vadd.xlane.f32.xlu0 %v480
      %v482 = vpop.xlane.xlu0 %481
      %v483 = vsel %vm302, %v298, 0.0
      %484 = vadd.xlane.f32.xlu0 %v483
      %v485 = vpop.xlane.xlu0 %484
      %v486 = vsel %vm302, %v299, 0.0
      %487 = vadd.xlane.f32.xlu0 %v486
      %v488 = vpop.xlane.xlu0 %487
      %v489 = vsel %vm302, %v300, 0.0
      %490 = vadd.xlane.f32.xlu0 %v489
      %v491 = vpop.xlane.xlu0 %490
      %v492 = vsel %vm302, %v301, 0.0
      %493 = vadd.xlane.f32.xlu0 %v492
      %v494 = vpop.xlane.xlu0 %493
      %vm495 = vcmask 7168
      %496 = vst.msk [vmem:[%s165] sm:$0xff] %vm495, %v305
      %497 = vst.msk [vmem:[%s165 + $0x8] sm:$0xff] %vm495, %v308
      %498 = vst.msk [vmem:[%s165 + $0x10] sm:$0xff] %vm495, %v311
      %499 = vst.msk [vmem:[%s165 + $0x18] sm:$0xff] %vm495, %v314
      %500 = vst.msk [vmem:[%s165 + $0x20] sm:$0xff] %vm495, %v317
      %501 = vst.msk [vmem:[%s165 + $0x28] sm:$0xff] %vm495, %v320
      %502 = vst.msk [vmem:[%s165 + $0x30] sm:$0xff] %vm495, %v323
      %503 = vst.msk [vmem:[%s165 + $0x38] sm:$0xff] %vm495, %v326
      %504 = vst.msk [vmem:[%s165 + $0x40] sm:$0xff] %vm495, %v329
      %505 = vst.msk [vmem:[%s165 + $0x48] sm:$0xff] %vm495, %v332
      %506 = vst.msk [vmem:[%s165 + $0x50] sm:$0xff] %vm495, %v335
      %507 = vst.msk [vmem:[%s165 + $0x58] sm:$0xff] %vm495, %v338
      %508 = vst.msk [vmem:[%s165 + $0x60] sm:$0xff] %vm495, %v341
      %509 = vst.msk [vmem:[%s165 + $0x68] sm:$0xff] %vm495, %v344
      %510 = vst.msk [vmem:[%s165 + $0x70] sm:$0xff] %vm495, %v347
      %511 = vst.msk [vmem:[%s165 + $0x78] sm:$0xff] %vm495, %v350
      %512 = vst.msk [vmem:[%s165 + $0x80] sm:$0xff] %vm495, %v353
      %513 = vst.msk [vmem:[%s165 + $0x88] sm:$0xff] %vm495, %v356
      %514 = vst.msk [vmem:[%s165 + $0x90] sm:$0xff] %vm495, %v359
      %515 = vst.msk [vmem:[%s165 + $0x98] sm:$0xff] %vm495, %v362
      %516 = vst.msk [vmem:[%s165 + $0xa0] sm:$0xff] %vm495, %v365
      %517 = vst.msk [vmem:[%s165 + $0xa8] sm:$0xff] %vm495, %v368
      %518 = vst.msk [vmem:[%s165 + $0xb0] sm:$0xff] %vm495, %v371
      %519 = vst.msk [vmem:[%s165 + $0xb8] sm:$0xff] %vm495, %v374
      %520 = vst.msk [vmem:[%s165 + $0xc0] sm:$0xff] %vm495, %v377
      %521 = vst.msk [vmem:[%s165 + $0xc8] sm:$0xff] %vm495, %v380
      %522 = vst.msk [vmem:[%s165 + $0xd0] sm:$0xff] %vm495, %v383
      %523 = vst.msk [vmem:[%s165 + $0xd8] sm:$0xff] %vm495, %v386
      %524 = vst.msk [vmem:[%s165 + $0xe0] sm:$0xff] %vm495, %v389
      %525 = vst.msk [vmem:[%s165 + $0xe8] sm:$0xff] %vm495, %v392
      %526 = vst.msk [vmem:[%s165 + $0xf0] sm:$0xff] %vm495, %v395
      %527 = vst.msk [vmem:[%s165 + $0xf8] sm:$0xff] %vm495, %v398
      %528 = vst.msk [vmem:[%s165 + $0x100] sm:$0xff] %vm495, %v401
      %529 = vst.msk [vmem:[%s165 + $0x108] sm:$0xff] %vm495, %v404
      %530 = vst.msk [vmem:[%s165 + $0x110] sm:$0xff] %vm495, %v407
      %531 = vst.msk [vmem:[%s165 + $0x118] sm:$0xff] %vm495, %v410
      %532 = vst.msk [vmem:[%s165 + $0x120] sm:$0xff] %vm495, %v413
      %533 = vst.msk [vmem:[%s165 + $0x128] sm:$0xff] %vm495, %v416
      %534 = vst.msk [vmem:[%s165 + $0x130] sm:$0xff] %vm495, %v419
      %535 = vst.msk [vmem:[%s165 + $0x138] sm:$0xff] %vm495, %v422
      %536 = vst.msk [vmem:[%s165 + $0x140] sm:$0xff] %vm495, %v425
      %537 = vst.msk [vmem:[%s165 + $0x148] sm:$0xff] %vm495, %v428
      %538 = vst.msk [vmem:[%s165 + $0x150] sm:$0xff] %vm495, %v431
      %539 = vst.msk [vmem:[%s165 + $0x158] sm:$0xff] %vm495, %v434
      %540 = vst.msk [vmem:[%s165 + $0x160] sm:$0xff] %vm495, %v437
      %541 = vst.msk [vmem:[%s165 + $0x168] sm:$0xff] %vm495, %v440
      %542 = vst.msk [vmem:[%s165 + $0x170] sm:$0xff] %vm495, %v443
      %543 = vst.msk [vmem:[%s165 + $0x178] sm:$0xff] %vm495, %v446
      %544 = vst.msk [vmem:[%s165 + $0x180] sm:$0xff] %vm495, %v449
      %545 = vst.msk [vmem:[%s165 + $0x188] sm:$0xff] %vm495, %v452
      %546 = vst.msk [vmem:[%s165 + $0x190] sm:$0xff] %vm495, %v455
      %547 = vst.msk [vmem:[%s165 + $0x198] sm:$0xff] %vm495, %v458
      %548 = vst.msk [vmem:[%s165 + $0x1a0] sm:$0xff] %vm495, %v461
      %549 = vst.msk [vmem:[%s165 + $0x1a8] sm:$0xff] %vm495, %v464
      %550 = vst.msk [vmem:[%s165 + $0x1b0] sm:$0xff] %vm495, %v467
      %551 = vst.msk [vmem:[%s165 + $0x1b8] sm:$0xff] %vm495, %v470
      %552 = vst.msk [vmem:[%s165 + $0x1c0] sm:$0xff] %vm495, %v473
      %553 = vst.msk [vmem:[%s165 + $0x1c8] sm:$0xff] %vm495, %v476
      %554 = vst.msk [vmem:[%s165 + $0x1d0] sm:$0xff] %vm495, %v479
      %555 = vst.msk [vmem:[%s165 + $0x1d8] sm:$0xff] %vm495, %v482
      %556 = vst.msk [vmem:[%s165 + $0x1e0] sm:$0xff] %vm495, %v485
      %557 = vst.msk [vmem:[%s165 + $0x1e8] sm:$0xff] %vm495, %v488
      %558 = vst.msk [vmem:[%s165 + $0x1f0] sm:$0xff] %vm495, %v491
      %559 = vst.msk [vmem:[%s165 + $0x1f8] sm:$0xff] %vm495, %v494
      %s560 = smul.u32 64, %s13
      %p561 = scmp.lt.s32.totalorder %s560, 127
      %s562 = scalar_select %p561, %s560, 127
      %s563 = smul.addr %s562, 8
      %s564 = scalar_lea.vmem %s2, %s563
      // Predicated region
      $region29: #{tpu_custom_call.1} parent=27 // pred_check
        %p565 = pneg %p78
      $region30: #{tpu_custom_call.1} parent=27 // pred_check_branch
        %567 = sbr.rel (%p565) target = $region32
      $region31: #{tpu_custom_call.1} parent=27 // pred_region
        %s568 = smul.u32 64, %s13
      $region32: #{tpu_custom_call.1} parent=27 // pred_fallthru
        _
    $region28: #{tpu_custom_call.1} parent=5 // pred_fallthru
      _
    %p569 = scmp.le.s32.totalorder 2, %s8
    // Predicated region
    $region33: #{tpu_custom_call.1} parent=5 // pred_check
      %p570 = pneg %p569
    $region34: #{tpu_custom_call.1} parent=5 // pred_check_branch
      %572 = sbr.rel (%p570) target = $region36
    $region35: #{tpu_custom_call.1} parent=5 // pred_region
      %s573 = ssub.s32 %s8, 2
      // Predicated region
      $region37: #{tpu_custom_call.1} parent=35 // pred_check
        %p574 = pneg %p84
      $region38: #{tpu_custom_call.1} parent=35 // pred_check_branch
        %576 = sbr.rel (%p574) target = $region40
      $region39: #{tpu_custom_call.1} parent=35 // pred_region
        %s577 = smul.u32 64, %s14
        %p578 = scmp.lt.s32.totalorder %s577, 127
        %s579 = scalar_select %p578, %s577, 127
        %s580 = smul.addr %s579, 8
        %s581 = scalar_lea.vmem %s2, %s580
      $region40: #{tpu_custom_call.1} parent=35 // pred_fallthru
        _
    $region36: #{tpu_custom_call.1} parent=5 // pred_fallthru
      _
  $region6: #{tpu_custom_call.1} parent=0 // loop_footer
    %s12 = sadd.s32 1, %s8
  $region7: #{tpu_custom_call.1} parent=0 // loop_footer_branch
    %7 = sbr.rel target = $region3
  $region8: #{tpu_custom_call.1} parent=0 // loop_exit
    _

</llo_original>
